<compile_context>
chip_gen: v5e
topology: v5e:2x2
jax: 0.10.0
libtpu: 0.0.40
codegen_flags: <defaults>
</compile_context>

<pallas_src>
import functools
import math

import jax
import jax.numpy as jnp
from jax import lax
from jax.experimental import pallas as pl
from jax.experimental.pallas import tpu as pltpu

_ACC_ROWS = 32  # output accumulator rows: 4 independent f32 vreg chains per lane strip.


def _tpu_generation():
    """Best-effort TPU generation probe at trace time ("v7" / "v6" / "v5" / "other")."""
    try:
        kind = jax.devices()[0].device_kind.lower()
    except Exception:
        return "other"
    for gen, tags in (("v7", ("v7", "7x", "tpu7")),
                      ("v6", ("v6",)),
                      ("v5", ("v5",))):
        if any(t in kind for t in tags):
            return gen
    return "other"


def _l1_partial_kernel(a_ref, b_ref, o_ref, *, rows_total, row_block, acc_rows,
                       need_mask):
    c = pl.program_id(0)          # core-split axis
    t = pl.program_id(1)          # sequential tile axis ("arbitrary")

    @pl.when(t == 0)
    def _init():
        o_ref[...] = jnp.zeros_like(o_ref)

    # Upcast BEFORE subtracting (cheaper than emulated bf16 VALU on v5e, more precise).
    a = a_ref[...].astype(jnp.float32)
    b = b_ref[...].astype(jnp.float32)
    diff = jnp.abs(a - b)                                   # (row_block, cols) f32
    folded = (row_block // acc_rows, acc_rows, diff.shape[1])

    if need_mask:
        # Logical (un-clamped) tile id -> rows beyond rows_total are either the
        # ragged tail of the last tile or a clamped duplicate tile (fully masked).
        blk = c * pl.num_programs(1) + t
        row_start = blk * row_block
        is_interior = row_start + row_block <= rows_total

        @pl.when(is_interior)
        def _acc_unmasked():
            o_ref[...] += diff.reshape(folded).sum(axis=0)

        @pl.when(jnp.logical_not(is_interior))
        def _acc_masked():
            row_ids = row_start + lax.broadcasted_iota(jnp.int32, diff.shape, 0)
            masked = jnp.where(row_ids < rows_total, diff, 0.0)
            o_ref[...] += masked.reshape(folded).sum(axis=0)
    else:
        o_ref[...] += diff.reshape(folded).sum(axis=0)


def mel_l1_loss(melspec_gen, melspec_real, *, target_block_bytes=None,
                num_splits=None, min_pallas_elements=1 << 20,
                use_core_parallel=None):
    """Mean absolute error between two mel-spectrograms (== torch.nn.L1Loss())."""
    assert melspec_gen.shape == melspec_real.shape, "shapes must match"
    n = melspec_gen.size
    assert n > 0, "empty input"

    # ---- small-input fast path: pallas launch overhead dominates here -------
    if n < min_pallas_elements:
        return jnp.mean(jnp.abs(melspec_gen.astype(jnp.float32)
                                - melspec_real.astype(jnp.float32)))

    # ---- generation-aware defaults ------------------------------------------
    gen = _tpu_generation()
    if target_block_bytes is None:
        target_block_bytes = {"v7": 5 << 20, "v6": 4 << 20}.get(gen, 2 << 20)
    if num_splits is None:
        num_splits = 2 if gen == "v7" else 1          # only v7x has 2 TensorCores
    if use_core_parallel is None:
        use_core_parallel = (gen == "v7") and num_splits > 1

    if melspec_gen.ndim == 0:
        melspec_gen = melspec_gen.reshape(1)
        melspec_real = melspec_real.reshape(1)

    itemsize = jnp.dtype(melspec_gen.dtype).itemsize

    # ---- copy-free 2-D view --------------------------------------------------
    if n % 128 == 0:
        # Perfectly lane-dense and fully contiguous blocks.
        g2 = melspec_gen.reshape(-1, 128)
        r2 = melspec_real.reshape(-1, 128)
    else:
        # Ragged: merge as many trailing dims as possible (largest trailing
        # extent) so lane padding is negligible, subject to a 32-row block
        # fitting the per-block VMEM budget.
        shape = melspec_gen.shape
        chosen_cols = None
        for k in range(len(shape)):
            cols_k = int(math.prod(shape[k:]))
            cols_k_padded = ((cols_k + 127) // 128) * 128
            if _ACC_ROWS * cols_k_padded * itemsize <= target_block_bytes:
                chosen_cols = cols_k
                break
        if chosen_cols is None:  # pathological huge trailing dim: native last dim
            chosen_cols = shape[-1]
        g2 = melspec_gen.reshape(-1, chosen_cols)
        r2 = melspec_real.reshape(-1, chosen_cols)

    rows, cols = g2.shape
    cols_padded = ((cols + 127) // 128) * 128

    # ---- row tiling ----------------------------------------------------------
    row_block = (target_block_bytes // (cols_padded * itemsize)) // _ACC_ROWS * _ACC_ROWS
    row_block = max(_ACC_ROWS, row_block)
    row_block = min(row_block, pl.cdiv(rows, _ACC_ROWS) * _ACC_ROWS)

    total_tiles = pl.cdiv(rows, row_block)
    tiles_per_core = pl.cdiv(total_tiles, num_splits)
    # Masking is compiled in only when some block can contain out-of-range rows.
    need_mask = (num_splits * tiles_per_core * row_block) != rows

    def in_map(c, t):
        blk = c * tiles_per_core + t
        return (jnp.minimum(blk, total_tiles - 1), 0)

    # Deeper input pipelining only pays off on longer sequential grids.
    def make_in_spec():
        if tiles_per_core > 2:
            try:
                return pl.BlockSpec((row_block, cols), in_map,
                                    pipeline_mode=pl.Buffered(3))
            except TypeError:
                pass
        return pl.BlockSpec((row_block, cols), in_map)

    kernel = functools.partial(
        _l1_partial_kernel,
        rows_total=rows, row_block=row_block, acc_rows=_ACC_ROWS,
        need_mask=need_mask)

    # ---- VMEM budget from actual buffer math ---------------------------------
    block_bytes = row_block * cols_padded * itemsize
    out_bytes = _ACC_ROWS * cols_padded * 4
    vmem_needed = 2 * 3 * block_bytes + 2 * out_bytes + (4 << 20)  # inputs + out + headroom
    vmem_cap = (56 << 20) if gen == "v7" else (100 << 20)
    vmem_limit = int(min(max(vmem_needed, 16 << 20), vmem_cap))

    out_rows = num_splits * _ACC_ROWS
    cost = pl.CostEstimate(
        flops=3 * n,
        transcendentals=0,
        bytes_accessed=2 * n * itemsize + out_rows * cols * 4)

    def run(dim_semantics):
        return pl.pallas_call(
            kernel,
            out_shape=jax.ShapeDtypeStruct((out_rows, cols), jnp.float32),
            grid_spec=pltpu.PrefetchScalarGridSpec(
                num_scalar_prefetch=0,
                grid=(num_splits, tiles_per_core),
                in_specs=[make_in_spec(), make_in_spec()],
                out_specs=pl.BlockSpec((_ACC_ROWS, cols), lambda c, t: (c, 0)),
            ),
            compiler_params=pltpu.CompilerParams(
                dimension_semantics=dim_semantics,
                vmem_limit_bytes=vmem_limit,
            ),
            cost_estimate=cost,
        )(g2, r2)

    if use_core_parallel:
        # v7x: shard the leading size-2 axis across the two TensorCores.
        try:
            partials = run((pltpu.CORE_PARALLEL, pltpu.ARBITRARY))
        except Exception:
            # Fallback if CORE_PARALLEL is rejected on this toolchain/topology.
            partials = run(("parallel", "arbitrary"))
    else:
        partials = run(("parallel", "arbitrary"))

    # One tiny cross-lane reduction + mean scale, outside the hot loop.
    return jnp.sum(partials) * (1.0 / n)


if __name__ == "__main__":
    key = jax.random.PRNGKey(0)
    k1, k2, k3, k4 = jax.random.split(key, 4)

    # Mel-spectrogram-like inputs: (batch=2, n_mels=80, frames=64)
    g = jax.random.normal(k1, (2, 80, 64), dtype=jnp.float32)
    r = jax.random.normal(k2, (2, 80, 64), dtype=jnp.float32)
    ref = jnp.mean(jnp.abs(g - r))

    # 1) Kernel path (force past the small-input fast path).
    loss = mel_l1_loss(g, r, min_pallas_elements=0)
    jax.block_until_ready(loss)
    assert jnp.allclose(loss, ref, rtol=1e-5, atol=1e-6), (loss, ref)

    # 2) Multi-tile sequential accumulation + ragged-tail mask.
    multi = mel_l1_loss(g, r, min_pallas_elements=0, target_block_bytes=32 * 1024)
    jax.block_until_ready(multi)
    assert jnp.allclose(multi, ref, rtol=1e-5, atol=1e-6)

    # 3) Ragged shape (n % 128 != 0): wide merged trailing dim + row mask.
    a = jax.random.normal(k3, (3, 80, 67), dtype=jnp.float32)
    b = jax.random.normal(k4, (3, 80, 67), dtype=jnp.float32)
    ragged = mel_l1_loss(a, b, min_pallas_elements=0)
    jax.block_until_ready(ragged)
    assert jnp.allclose(ragged, jnp.mean(jnp.abs(a - b)), rtol=1e-5, atol=1e-6)

    # 4) bf16 inputs (upcast-before-subtract path).
    gb, rb = g.astype(jnp.bfloat16), r.astype(jnp.bfloat16)
    bref = jnp.mean(jnp.abs(gb.astype(jnp.float32) - rb.astype(jnp.float32)))
    bl = mel_l1_loss(gb, rb, min_pallas_elements=0)
    jax.block_until_ready(bl)
    assert jnp.allclose(bl, bref, rtol=1e-5, atol=1e-6)

    # 5) Small-input fast path (default threshold -> fused XLA reduction).
    fp = mel_l1_loss(g, r)
    jax.block_until_ready(fp)
    assert jnp.allclose(fp, ref, rtol=1e-5, atol=1e-6)

    print("KERNEL_OK")
</pallas_src>

<mosaic_0001>
module attributes {stable_mosaic.version = 11 : i64} {
  func.func @_l1_partial_kernel(%arg0: i32, %arg1: i32, %arg2: memref<96x128xf32, #tpu.memory_space<vmem>>, %arg3: memref<96x128xf32, #tpu.memory_space<vmem>>, %arg4: memref<32x128xf32, #tpu.memory_space<vmem>>) attributes {dimension_semantics = [#tpu.dimension_semantics<parallel>, #tpu.dimension_semantics<arbitrary>], iteration_bounds = array<i64: 1, 1>, scalar_prefetch = 0 : i64, scratch_operands = 0 : i64, tpu.core_type = #tpu.core_type<tc>, window_params = [{transform_indices = @transform_0, window_bounds = array<i64: 96, 128>}, {transform_indices = @transform_1, window_bounds = array<i64: 96, 128>}, {transform_indices = @transform_2, window_bounds = array<i64: 32, 128>}]} {
    %c0_i32 = arith.constant 0 : i32
    %0 = arith.cmpi eq, %arg1, %c0_i32 : i32
    %1 = arith.extui %0 : i1 to i32
    %c0_i32_0 = arith.constant 0 : i32
    %2 = arith.cmpi ne, %1, %c0_i32_0 : i32
    scf.if %2 {
      %cst = arith.constant 0.000000e+00 : f32
      %17 = vector.broadcast %cst : f32 to vector<32x128xf32>
      %c0_7 = arith.constant 0 : index
      %c0_8 = arith.constant 0 : index
      %18 = vector.load %arg4[%c0_7, %c0_8] : memref<32x128xf32, #tpu.memory_space<vmem>>, vector<32x128xf32>
      tpu.vector_store %arg4[%c0_7, %c0_8], %17 {strides = array<i32>} : memref<32x128xf32, #tpu.memory_space<vmem>>, vector<32x128xf32>,
    } else {
    }
    %c0 = arith.constant 0 : index
    %c0_1 = arith.constant 0 : index
    %3 = vector.load %arg2[%c0, %c0_1] : memref<96x128xf32, #tpu.memory_space<vmem>>, vector<96x128xf32>
    %c0_2 = arith.constant 0 : index
    %c0_3 = arith.constant 0 : index
    %4 = vector.load %arg3[%c0_2, %c0_3] : memref<96x128xf32, #tpu.memory_space<vmem>>, vector<96x128xf32>
    %5 = arith.subf %3, %4 : vector<96x128xf32>
    %6 = math.absf %5 : vector<96x128xf32>
    %c1_i32 = arith.constant 1 : i32
    %7 = arith.muli %arg0, %c1_i32 : i32
    %8 = arith.addi %7, %arg1 : i32
    %c96_i32 = arith.constant 96 : i32
    %9 = arith.muli %8, %c96_i32 : i32
    %c96_i32_4 = arith.constant 96 : i32
    %10 = arith.addi %9, %c96_i32_4 : i32
    %c80_i32 = arith.constant 80 : i32
    %11 = arith.cmpi sle, %10, %c80_i32 : i32
    %12 = arith.extui %11 : i1 to i32
    %c0_i32_5 = arith.constant 0 : i32
    %13 = arith.cmpi ne, %12, %c0_i32_5 : i32
    scf.if %13 {
      %c0_7 = arith.constant 0 : index
      %c0_8 = arith.constant 0 : index
      %17 = vector.load %arg4[%c0_7, %c0_8] : memref<32x128xf32, #tpu.memory_space<vmem>>, vector<32x128xf32>
      %18 = vector.shape_cast %6 : vector<96x128xf32> to vector<3x32x128xf32>
      %cst = arith.constant dense<0.000000e+00> : vector<32x128xf32>
      %19 = vector.multi_reduction <add>, %18, %cst [0] : vector<3x32x128xf32> to vector<32x128xf32>
      %20 = arith.addf %17, %19 : vector<32x128xf32>
      %c0_9 = arith.constant 0 : index
      %c0_10 = arith.constant 0 : index
      %21 = vector.load %arg4[%c0_9, %c0_10] : memref<32x128xf32, #tpu.memory_space<vmem>>, vector<32x128xf32>
      tpu.vector_store %arg4[%c0_9, %c0_10], %20 {strides = array<i32>} : memref<32x128xf32, #tpu.memory_space<vmem>>, vector<32x128xf32>,
    } else {
    }
    %true = arith.constant true
    %14 = arith.xori %11, %true : i1
    %15 = arith.extui %14 : i1 to i32
    %c0_i32_6 = arith.constant 0 : i32
    %16 = arith.cmpi ne, %15, %c0_i32_6 : i32
    scf.if %16 {
      %17 = tpu.iota {dimensions = array<i32: 0>} : vector<96x128xi32>
      %18 = vector.broadcast %9 : i32 to vector<96x128xi32>
      %19 = arith.addi %18, %17 : vector<96x128xi32>
      %c80_i32_7 = arith.constant 80 : i32
      %20 = vector.broadcast %c80_i32_7 : i32 to vector<96x128xi32>
      %21 = arith.cmpi slt, %19, %20 : vector<96x128xi32>
      %cst = arith.constant 0.000000e+00 : f32
      %22 = vector.broadcast %cst : f32 to vector<96x128xf32>
      %23 = arith.select %21, %6, %22 : vector<96x128xi1>, vector<96x128xf32>
      %c0_8 = arith.constant 0 : index
      %c0_9 = arith.constant 0 : index
      %24 = vector.load %arg4[%c0_8, %c0_9] : memref<32x128xf32, #tpu.memory_space<vmem>>, vector<32x128xf32>
      %25 = vector.shape_cast %23 : vector<96x128xf32> to vector<3x32x128xf32>
      %cst_10 = arith.constant dense<0.000000e+00> : vector<32x128xf32>
      %26 = vector.multi_reduction <add>, %25, %cst_10 [0] : vector<3x32x128xf32> to vector<32x128xf32>
      %27 = arith.addf %24, %26 : vector<32x128xf32>
      %c0_11 = arith.constant 0 : index
      %c0_12 = arith.constant 0 : index
      %28 = vector.load %arg4[%c0_11, %c0_12] : memref<32x128xf32, #tpu.memory_space<vmem>>, vector<32x128xf32>
      tpu.vector_store %arg4[%c0_11, %c0_12], %27 {strides = array<i32>} : memref<32x128xf32, #tpu.memory_space<vmem>>, vector<32x128xf32>,
    } else {
    }
    return
  }
  func.func @transform_0(%arg0: i32, %arg1: i32) -> (i32, i32) {
    %c1_i32 = arith.constant 1 : i32
    %0 = arith.muli %arg0, %c1_i32 : i32
    %1 = arith.addi %0, %arg1 : i32
    %c0_i32 = arith.constant 0 : i32
    %2 = arith.minsi %1, %c0_i32 : i32
    %c0_i32_0 = arith.constant 0 : i32
    %c0_i32_1 = arith.constant 0 : i32
    return %2, %c0_i32_0 : i32, i32
  }
  func.func @transform_1(%arg0: i32, %arg1: i32) -> (i32, i32) {
    %c1_i32 = arith.constant 1 : i32
    %0 = arith.muli %arg0, %c1_i32 : i32
    %1 = arith.addi %0, %arg1 : i32
    %c0_i32 = arith.constant 0 : i32
    %2 = arith.minsi %1, %c0_i32 : i32
    %c0_i32_0 = arith.constant 0 : i32
    %c0_i32_1 = arith.constant 0 : i32
    return %2, %c0_i32_0 : i32, i32
  }
  func.func @transform_2(%arg0: i32, %arg1: i32) -> (i32, i32) {
    %c0_i32 = arith.constant 0 : i32
    %c0_i32_0 = arith.constant 0 : i32
    return %arg0, %c0_i32 : i32, i32
  }
}

</mosaic_0001>

<llo_original>
// kernel: tpu_custom_call.1
$region0: #{tpu_custom_call.1}
  #allocation0 [shape = 'u32[]', space=smem, size = 0x4, offset = 0x4, fixed_abs, tag = 'smem constant byte address 0x4 - core index']
  #allocation1 [shape = 'u32[72,128]{1,0:T(1,128)}', space=vmem, size = 0x9000, scoped, tag = 'internal scratch']
  %s0 = inlined_call_operand.hbm [shape: f32[80,128], index: 0, kind: input, shape index: {}]
  %s1 = inlined_call_operand.hbm [shape: f32[80,128], index: 1, kind: input, shape index: {}]
  %s2 = inlined_call_operand.hbm [shape: f32[32,128], index: 2, kind: output, shape index: {}]
  %s3 = sld [smem:[#allocation0]]
  $region38: #{tpu_custom_call.1} parent=0
    _
  %s5 = ssub.s32 1, %s3
  %s6 = scalar_select 0, %s5, %s3
  $region1: #{tpu_custom_call.1} parent=0
    #allocation2 [shape = 'u8[49152]{0}', space=vmem, size = 0xc000, scoped, tag = 'input window, operand 0, single buffered']
    #allocation3 [shape = 's32[1]{0}', space=sflag, size = 0x4, scoped, tag = 'scoped memory for tpu_custom_call.1']
    #allocation4 [shape = 's32[1]{0}', space=sflag, size = 0x4, scoped, tag = 'scoped memory for tpu_custom_call.1']
    #allocation5 [shape = 'u8[49152]{0}', space=vmem, size = 0xc000, scoped, tag = 'input window, operand 1, single buffered']
    #allocation6 [shape = 's32[1]{0}', space=sflag, size = 0x4, scoped, tag = 'scoped memory for tpu_custom_call.1']
    #allocation7 [shape = 'u8[16384]{0}', space=vmem, size = 0x4000, scoped, tag = 'output window, operand 0, single buffered']
    %7 = vsyncpa [#allocation3], 0
    %8 = vsyncpa [#allocation6], 0
    %9 = vsyncpa [#allocation4], 0
    // Predicated region
    $region2: #{tpu_custom_call.1} parent=1 // pred_check
      _
    $region3: #{tpu_custom_call.1} parent=1 // pred_check_branch
      %11 = sbr.rel (0) target = $region5
    $region4: #{tpu_custom_call.1} parent=1 // pred_region
      %s12 = sadd.s32 0, 0
      %p13 = scmp.lt.s32.totalorder %s12, 0
      %s14 = scalar_select %p13, %s12, 0
      %s15 = smul.u32 12, %s14
      %s16 = ssub.s32 10, %s15
      %s17 = smul.u32 8, %s16
      %s18 = ssub.s32 96, %s17
      %s19 = sshll.u32 %s18, 4
      %20 = vsyncadd [#allocation3], %s19
      %p21 = scmp.ne.s32.totalorder 0, %s17
      %s22 = smul.addr %s15, 8
      %s23 = scalar_lea.hbm %s0, %s22
      %s24 = smul.u32 8, %s16
      %s25 = sshll.u32 %s23, 4
      %s26 = int_to_ptr.hbm [resolvable:$true] %s25
      %s27 = sshll.u32 [#allocation2], 4
      %s28 = int_to_ptr.vmem [resolvable:$true] %s27
      %s29 = sshll.u32 %s24, 4
      %33 = dma.hbm_to_vmem [thread:$0]  (%p21), %s26, %s29, %s28, [#allocation3], 128, 128, 8
    $region5: #{tpu_custom_call.1} parent=1 // pred_fallthru
      _
    // Predicated region
    $region6: #{tpu_custom_call.1} parent=1 // pred_check
      _
    $region7: #{tpu_custom_call.1} parent=1 // pred_check_branch
      %35 = sbr.rel (0) target = $region9
    $region8: #{tpu_custom_call.1} parent=1 // pred_region
      %s36 = sadd.s32 0, 0
      %p37 = scmp.lt.s32.totalorder %s36, 0
      %s38 = scalar_select %p37, %s36, 0
      %s39 = smul.u32 12, %s38
      %s40 = ssub.s32 10, %s39
      %s41 = smul.u32 8, %s40
      %s42 = ssub.s32 96, %s41
      %s43 = sshll.u32 %s42, 4
      %44 = vsyncadd [#allocation6], %s43
      %p45 = scmp.ne.s32.totalorder 0, %s41
      %s46 = smul.addr %s39, 8
      %s47 = scalar_lea.hbm %s1, %s46
      %s48 = smul.u32 8, %s40
      %s49 = sshll.u32 %s47, 4
      %s50 = int_to_ptr.hbm [resolvable:$true] %s49
      %s51 = sshll.u32 [#allocation5], 4
      %s52 = int_to_ptr.vmem [resolvable:$true] %s51
      %s53 = sshll.u32 %s48, 4
      %57 = dma.hbm_to_vmem [thread:$0]  (%p45), %s50, %s53, %s52, [#allocation6], 128, 128, 8
    $region9: #{tpu_custom_call.1} parent=1 // pred_fallthru
      _
    // Predicated region
    $region10: #{tpu_custom_call.1} parent=1 // pred_check
      _
    $region11: #{tpu_custom_call.1} parent=1 // pred_check_branch
      %59 = sbr.rel (0) target = $region13
    $region12: #{tpu_custom_call.1} parent=1 // pred_region
      %61 = dma.done [#allocation3], 1536
    $region13: #{tpu_custom_call.1} parent=1 // pred_fallthru
      _
    // Predicated region
    $region14: #{tpu_custom_call.1} parent=1 // pred_check
      _
    $region15: #{tpu_custom_call.1} parent=1 // pred_check_branch
      %63 = sbr.rel (0) target = $region17
    $region16: #{tpu_custom_call.1} parent=1 // pred_region
      %65 = dma.done [#allocation6], 1536
    $region17: #{tpu_custom_call.1} parent=1 // pred_fallthru
      _
    %s66 = sadd.s32 0, 0
    %p67 = scmp.lt.s32.totalorder %s66, 0
    %s68 = scalar_select %p67, %s66, 0
    %s69 = smul.u32 12, %s68
    %s70 = ssub.s32 10, %s69
    %s71 = smul.u32 8, %s70
    %s72 = sadd.s32 0, 0
    %p73 = scmp.lt.s32.totalorder %s72, 0
    %s74 = scalar_select %p73, %s72, 0
    %s75 = smul.u32 12, %s74
    %s76 = ssub.s32 10, %s75
    %s77 = smul.u32 8, %s76
    %p78 = scmp.eq.s32.totalorder 0, 0
    // Predicated region
    $region18: #{tpu_custom_call.1} parent=1 // pred_check
      %p79 = pneg %p78
    $region19: #{tpu_custom_call.1} parent=1 // pred_check_branch
      %81 = sbr.rel (%p79) target = $region21
    $region20: #{tpu_custom_call.1} parent=1 // pred_region
      %82 = vst [vmem:[#allocation7] sm:$0xff] 0.0
      %83 = vst [vmem:[#allocation7 + $0x8] sm:$0xff] 0.0
      %84 = vst [vmem:[#allocation7 + $0x10] sm:$0xff] 0.0
      %85 = vst [vmem:[#allocation7 + $0x18] sm:$0xff] 0.0
    $region21: #{tpu_custom_call.1} parent=1 // pred_fallthru
      _
    %v86 = vld [vmem:[#allocation2] sm:$0xff]
    %v87 = vld [vmem:[#allocation2 + $0x8] sm:$0xff]
    %v88 = vld [vmem:[#allocation2 + $0x10] sm:$0xff]
    %v89 = vld [vmem:[#allocation2 + $0x18] sm:$0xff]
    %v90 = vld [vmem:[#allocation2 + $0x20] sm:$0xff]
    %v91 = vld [vmem:[#allocation2 + $0x28] sm:$0xff]
    %v92 = vld [vmem:[#allocation2 + $0x30] sm:$0xff]
    %v93 = vld [vmem:[#allocation2 + $0x38] sm:$0xff]
    %v94 = vld [vmem:[#allocation2 + $0x40] sm:$0xff]
    %v95 = vld [vmem:[#allocation2 + $0x48] sm:$0xff]
    %v96 = vld [vmem:[#allocation2 + $0x50] sm:$0xff]
    %v97 = vld [vmem:[#allocation2 + $0x58] sm:$0xff]
    %v98 = vld [vmem:[#allocation5] sm:$0xff]
    %v99 = vld [vmem:[#allocation5 + $0x8] sm:$0xff]
    %v100 = vld [vmem:[#allocation5 + $0x10] sm:$0xff]
    %v101 = vld [vmem:[#allocation5 + $0x18] sm:$0xff]
    %v102 = vld [vmem:[#allocation5 + $0x20] sm:$0xff]
    %v103 = vld [vmem:[#allocation5 + $0x28] sm:$0xff]
    %v104 = vld [vmem:[#allocation5 + $0x30] sm:$0xff]
    %v105 = vld [vmem:[#allocation5 + $0x38] sm:$0xff]
    %v106 = vld [vmem:[#allocation5 + $0x40] sm:$0xff]
    %v107 = vld [vmem:[#allocation5 + $0x48] sm:$0xff]
    %v108 = vld [vmem:[#allocation5 + $0x50] sm:$0xff]
    %v109 = vld [vmem:[#allocation5 + $0x58] sm:$0xff]
    %v110 = vsub.f32 %v86, %v98
    %v111 = vsub.f32 %v87, %v99
    %v112 = vsub.f32 %v88, %v100
    %v113 = vsub.f32 %v89, %v101
    %v114 = vsub.f32 %v90, %v102
    %v115 = vsub.f32 %v91, %v103
    %v116 = vsub.f32 %v92, %v104
    %v117 = vsub.f32 %v93, %v105
    %v118 = vsub.f32 %v94, %v106
    %v119 = vsub.f32 %v95, %v107
    %v120 = vsub.f32 %v96, %v108
    %v121 = vsub.f32 %v97, %v109
    %v122 = vand.u32 2147483647, %v110
    %v123 = vand.u32 2147483647, %v111
    %v124 = vand.u32 2147483647, %v112
    %v125 = vand.u32 2147483647, %v113
    %v126 = vand.u32 2147483647, %v114
    %v127 = vand.u32 2147483647, %v115
    %v128 = vand.u32 2147483647, %v116
    %v129 = vand.u32 2147483647, %v117
    %v130 = vand.u32 2147483647, %v118
    %v131 = vand.u32 2147483647, %v119
    %v132 = vand.u32 2147483647, %v120
    %v133 = vand.u32 2147483647, %v121
    %s134 = sadd.s32 0, 0
    %s135 = smul.u32 %s134, 96
    %s136 = sadd.s32 %s135, 96
    %p137 = scmp.le.s32.totalorder %s136, 80
    // Predicated region
    $region22: #{tpu_custom_call.1} parent=1 // pred_check
      %p138 = pneg %p137
    $region23: #{tpu_custom_call.1} parent=1 // pred_check_branch
      %140 = sbr.rel (%p138) target = $region25
    $region24: #{tpu_custom_call.1} parent=1 // pred_region
      %v141 = vld [vmem:[#allocation7] sm:$0xff]
      %v142 = vld [vmem:[#allocation7 + $0x8] sm:$0xff]
      %v143 = vld [vmem:[#allocation7 + $0x10] sm:$0xff]
      %v144 = vld [vmem:[#allocation7 + $0x18] sm:$0xff]
      %v145 = vadd.f32 %v122, %v126
      %v146 = vadd.f32 %v145, %v130
      %v147 = vadd.f32 %v123, %v127
      %v148 = vadd.f32 %v147, %v131
      %v149 = vadd.f32 %v124, %v128
      %v150 = vadd.f32 %v149, %v132
      %v151 = vadd.f32 %v125, %v129
      %v152 = vadd.f32 %v151, %v133
      %v153 = vadd.f32 %v141, %v146
      %v154 = vadd.f32 %v142, %v148
      %v155 = vadd.f32 %v143, %v150
      %v156 = vadd.f32 %v144, %v152
      %157 = vst [vmem:[#allocation7] sm:$0xff] %v153
      %158 = vst [vmem:[#allocation7 + $0x8] sm:$0xff] %v154
      %159 = vst [vmem:[#allocation7 + $0x10] sm:$0xff] %v155
      %160 = vst [vmem:[#allocation7 + $0x18] sm:$0xff] %v156
    $region25: #{tpu_custom_call.1} parent=1 // pred_fallthru
      _
    %p161 = scmp.gt.s32.totalorder %s136, 80
    // Predicated region
    $region26: #{tpu_custom_call.1} parent=1 // pred_check
      %p162 = pneg %p161
    $region27: #{tpu_custom_call.1} parent=1 // pred_check_branch
      %164 = sbr.rel (%p162) target = $region29
    $region28: #{tpu_custom_call.1} parent=1 // pred_region
      %v165 = vlaneseq
      %v166 = vshrl.u32 %v165, 7
      %v167 = vadd.s32 %v166, 8
      %v168 = vadd.s32 %v166, 16
      %v169 = vadd.s32 %v166, 24
      %v170 = vadd.s32 %v166, 32
      %v171 = vadd.s32 %v166, 40
      %v172 = vadd.s32 %v166, 48
      %v173 = vadd.s32 %v166, 56
      %v174 = vadd.s32 %v166, 64
      %v175 = vadd.s32 %v166, 72
      %v176 = vadd.s32 %v166, 80
      %v177 = vadd.s32 %v166, 88
      %v178 = vstv %s135
      %v179 = vadd.s32 %v178, %v166
      %v180 = vadd.s32 %v178, %v167
      %v181 = vadd.s32 %v178, %v168
      %v182 = vadd.s32 %v178, %v169
      %v183 = vadd.s32 %v178, %v170
      %v184 = vadd.s32 %v178, %v171
      %v185 = vadd.s32 %v178, %v172
      %v186 = vadd.s32 %v178, %v173
      %v187 = vadd.s32 %v178, %v174
      %v188 = vadd.s32 %v178, %v175
      %v189 = vadd.s32 %v178, %v176
      %v190 = vadd.s32 %v178, %v177
      %vm191 = vcmp.lt.s32.totalorder %v179, 80
      %vm192 = vcmp.lt.s32.totalorder %v180, 80
      %vm193 = vcmp.lt.s32.totalorder %v181, 80
      %vm194 = vcmp.lt.s32.totalorder %v182, 80
      %vm195 = vcmp.lt.s32.totalorder %v183, 80
      %vm196 = vcmp.lt.s32.totalorder %v184, 80
      %vm197 = vcmp.lt.s32.totalorder %v185, 80
      %vm198 = vcmp.lt.s32.totalorder %v186, 80
      %vm199 = vcmp.lt.s32.totalorder %v187, 80
      %vm200 = vcmp.lt.s32.totalorder %v188, 80
      %vm201 = vcmp.lt.s32.totalorder %v189, 80
      %vm202 = vcmp.lt.s32.totalorder %v190, 80
      %v203 = vsel %vm191, %v122, 0.0
      %v204 = vsel %vm192, %v123, 0.0
      %v205 = vsel %vm193, %v124, 0.0
      %v206 = vsel %vm194, %v125, 0.0
      %v207 = vsel %vm195, %v126, 0.0
      %v208 = vsel %vm196, %v127, 0.0
      %v209 = vsel %vm197, %v128, 0.0
      %v210 = vsel %vm198, %v129, 0.0
      %v211 = vsel %vm199, %v130, 0.0
      %v212 = vsel %vm200, %v131, 0.0
      %v213 = vsel %vm201, %v132, 0.0
      %v214 = vsel %vm202, %v133, 0.0
      %v215 = vld [vmem:[#allocation7] sm:$0xff]
      %v216 = vld [vmem:[#allocation7 + $0x8] sm:$0xff]
      %v217 = vld [vmem:[#allocation7 + $0x10] sm:$0xff]
      %v218 = vld [vmem:[#allocation7 + $0x18] sm:$0xff]
      %v219 = vadd.f32 %v203, %v207
      %v220 = vadd.f32 %v219, %v211
      %v221 = vadd.f32 %v204, %v208
      %v222 = vadd.f32 %v221, %v212
      %v223 = vadd.f32 %v205, %v209
      %v224 = vadd.f32 %v223, %v213
      %v225 = vadd.f32 %v206, %v210
      %v226 = vadd.f32 %v225, %v214
      %v227 = vadd.f32 %v215, %v220
      %v228 = vadd.f32 %v216, %v222
      %v229 = vadd.f32 %v217, %v224
      %v230 = vadd.f32 %v218, %v226
      %231 = vst [vmem:[#allocation7] sm:$0xff] %v227
      %232 = vst [vmem:[#allocation7 + $0x8] sm:$0xff] %v228
      %233 = vst [vmem:[#allocation7 + $0x10] sm:$0xff] %v229
      %234 = vst [vmem:[#allocation7 + $0x18] sm:$0xff] %v230
    $region29: #{tpu_custom_call.1} parent=1 // pred_fallthru
      _
    // Predicated region
    $region30: #{tpu_custom_call.1} parent=1 // pred_check
      _
    $region31: #{tpu_custom_call.1} parent=1 // pred_check_branch
      %236 = sbr.rel (0) target = $region33
    $region32: #{tpu_custom_call.1} parent=1 // pred_region
      %238 = vsyncadd [#allocation4], 0
      %s239 = sshll.u32 [#allocation7], 4
      %s240 = int_to_ptr.vmem [resolvable:$true] %s239
      %s241 = sshll.u32 %s2, 4
      %s242 = int_to_ptr.hbm [resolvable:$true] %s241
      %247 = dma.vmem_to_hbm [thread:$0]  %s240, 512, %s242, [#allocation4], 128, 128, 8
    $region33: #{tpu_custom_call.1} parent=1 // pred_fallthru
      _
    // Predicated region
    $region34: #{tpu_custom_call.1} parent=1 // pred_check
      _
    $region35: #{tpu_custom_call.1} parent=1 // pred_check_branch
      %249 = sbr.rel (0) target = $region37
    $region36: #{tpu_custom_call.1} parent=1 // pred_region
      %251 = dma.done [#allocation4], 512
    $region37: #{tpu_custom_call.1} parent=1 // pred_fallthru
      _
    %252 = vsyncpa [#allocation3], 1
    %253 = vsyncpa [#allocation6], 1
    %254 = vsyncpa [#allocation4], 1

</llo_original>
